<compile_context>
chip_gen: v5e
topology: v5e:2x2
jax: 0.10.0
libtpu: 0.0.40
codegen_flags: <defaults>
</compile_context>

<pallas_src>
import functools

import jax
import jax.numpy as jnp
from jax.experimental import pallas as pl
from jax.experimental.pallas import tpu as pltpu


# ---------------------------------------------------------------------------
# Pallas kernel: whole AttentionGate hot path for one (batch, pixel-tile).
#
# All blocks are lane-dense: pixels on the lane axis, channels on sublanes.
#   g_ref     : (F_g,  TP)                 gating-signal tile (native dtype)
#   x_ref     : (F_l,  TP)                 skip-connection tile (native dtype)
#   p_ref     : (F_int, F_g + F_l + 3) f32 packed parameters:
#                 [:, 0:F_g]            BN-folded W_g conv weight
#                 [:, F_g:F_g+F_l]      BN-folded W_x conv weight
#                 [:, F_g+F_l]          merged bias (shift_g + shift_x)
#                 [:, F_g+F_l+1]        BN-folded psi weight
#                 [0, F_g+F_l+2]        psi shift
#   out_ref   : (F_l,  TP)
# ---------------------------------------------------------------------------
def attention_gate_kernel(g_ref, x_ref, p_ref, out_ref, *, F_g, F_l):
    g = g_ref[...]                                   # (F_g, TP), native dtype
    x = x_ref[...]                                   # (F_l, TP), native dtype

    c = F_g + F_l
    wg = p_ref[:, 0:F_g].astype(g.dtype)             # (F_int, F_g)
    wx = p_ref[:, F_g:c].astype(x.dtype)             # (F_int, F_l)
    bias = p_ref[:, c:c + 1]                         # (F_int, 1) f32
    wp = p_ref[:, c + 1:c + 2]                       # (F_int, 1) f32
    tpsi = p_ref[0:1, c + 2:c + 3]                   # (1, 1)     f32

    # 1x1 convs with BN pre-folded into the weights; lane-dense MXU matmuls,
    # f32 accumulation (MXU is bf16-native, no activation upcast needed).
    h = jnp.dot(wg, g, preferred_element_type=jnp.float32)
    h = h + jnp.dot(wx, x, preferred_element_type=jnp.float32)
    h = jnp.maximum(h + bias, 0.0)                   # ReLU, (F_int, TP) f32

    # psi projection (F_int -> 1): VPU broadcast-mul + sublane reduce (XLU).
    p = jnp.sum(h * wp, axis=0, keepdims=True) + tpsi         # (1, TP) f32
    psi = jax.nn.sigmoid(p)                                    # (1, TP) f32

    # Gate in the native dtype (no full-tile f32 copy of x).
    out_ref[...] = x * psi.astype(out_ref.dtype)               # bcast channels


# ---------------------------------------------------------------------------
# Wrapper: BN folding + layout plumbing (reshape only, no transposes).
# ---------------------------------------------------------------------------
def fold_bn(conv_bias, gamma, beta, running_mean, running_var, eps=1e-5):
    """Fold eval-mode BatchNorm (and the conv bias) into per-channel scale/shift."""
    scale = gamma / jnp.sqrt(running_var + eps)
    shift = beta + (conv_bias - running_mean) * scale
    return scale, shift


def _default_tile_p(dtype):
    """Generation-aware pixel-tile: ~0.3-1 MiB per-step payload to amortize
    the ~0.35 us per-grid-step pipeline overhead."""
    try:
        kind = jax.devices()[0].device_kind.lower()
    except Exception:  # pragma: no cover
        kind = ""
    if "v5" in kind:
        tp = 8192
    elif "v6" in kind:
        tp = 16384
    else:  # v7x and newer (3.2 TB/s HBM needs larger per-step payload)
        tp = 32768
    if dtype == jnp.bfloat16:
        tp *= 2
    return tp


def attention_gate(g, x, params, *, tile_p=None):
    """g: (N, F_g, H, W), x: (N, F_l, H, W) (NCHW, like PyTorch). Returns NCHW."""
    N, F_g, H, W = g.shape
    F_l = x.shape[1]
    F_int = params["wg"].shape[0]
    P = H * W

    if tile_p is None:
        tile_p = _default_tile_p(x.dtype)

    # Free relayout: NCHW -> (N, C, H*W). Pixels end up on the lane axis.
    g3 = g.reshape(N, F_g, P)
    x3 = x.reshape(N, F_l, P)

    # --- fold eval-mode BN (and conv biases) into the conv weights -----------
    sg, tg = fold_bn(params["bg"], params["bn_g_gamma"], params["bn_g_beta"],
                     params["bn_g_mean"], params["bn_g_var"])
    sx, tx = fold_bn(params["bx"], params["bn_x_gamma"], params["bn_x_beta"],
                     params["bn_x_mean"], params["bn_x_var"])
    sp, tp_ = fold_bn(params["bp"], params["bn_p_gamma"], params["bn_p_beta"],
                      params["bn_p_mean"], params["bn_p_var"])

    wg = params["wg"].reshape(F_int, F_g).astype(jnp.float32) * sg[:, None]
    wx = params["wx"].reshape(F_int, F_l).astype(jnp.float32) * sx[:, None]
    wp = params["wp"].reshape(F_int).astype(jnp.float32) * sp[0]   # (F_int,)
    bias = tg + tx                                                 # merged shift

    # Pack ALL parameters into one resident (F_int, F_g+F_l+3) VMEM block.
    c = F_g + F_l
    packed = jnp.zeros((F_int, c + 3), jnp.float32)
    packed = packed.at[:, 0:F_g].set(wg)
    packed = packed.at[:, F_g:c].set(wx)
    packed = packed.at[:, c].set(bias)
    packed = packed.at[:, c + 1].set(wp)
    packed = packed.at[0, c + 2].set(tp_[0])

    # --- pixel tiling: no padding / slicing.  Full-extent lane block if the
    # image fits in one tile; otherwise 128-aligned tiles with a partial last
    # block handled by Pallas (reads padded, writes masked).
    if P <= tile_p:
        TP = P
    else:
        assert tile_p % 128 == 0
        TP = tile_p
    grid = (N, pl.cdiv(P, TP))

    act_spec = lambda C: pl.BlockSpec((None, C, TP), lambda n, p: (n, 0, p))
    param_spec = pl.BlockSpec((F_int, c + 3), lambda n, p: (0, 0))

    itemsize = jnp.dtype(x.dtype).itemsize
    cost = pl.CostEstimate(
        flops=2 * N * P * F_int * (F_g + F_l) + 4 * N * P * F_int,
        transcendentals=N * P,
        bytes_accessed=(F_g + 2 * F_l) * N * P * itemsize + packed.size * 4,
    )

    kernel = functools.partial(attention_gate_kernel, F_g=F_g, F_l=F_l)

    out3 = pl.pallas_call(
        kernel,
        out_shape=jax.ShapeDtypeStruct((N, F_l, P), x.dtype),
        grid_spec=pltpu.PrefetchScalarGridSpec(
            num_scalar_prefetch=0,
            grid=grid,
            in_specs=[
                act_spec(F_g),   # g tile
                act_spec(F_l),   # x tile
                param_spec,      # packed folded weights / biases
            ],
            out_specs=act_spec(F_l),
        ),
        compiler_params=pltpu.CompilerParams(
            # Both axes independent -> megacore sharding on v7x; no-op v5e/v6e.
            dimension_semantics=("parallel", "parallel"),
        ),
        cost_estimate=cost,
    )(g3, x3, packed)

    return out3.reshape(N, F_l, H, W)


# ---------------------------------------------------------------------------
# Pure-JAX reference (unfolded Conv + eval-mode BN) for a correctness check.
# ---------------------------------------------------------------------------
def _conv1x1(v, w, b):
    y = jnp.einsum("oc,nchw->nohw", w.reshape(w.shape[0], w.shape[1]), v)
    return y + b[None, :, None, None]


def _bn(v, gamma, beta, mean, var, eps=1e-5):
    inv = gamma / jnp.sqrt(var + eps)
    return (v - mean[None, :, None, None]) * inv[None, :, None, None] \
        + beta[None, :, None, None]


def attention_gate_ref(g, x, p):
    g1 = _bn(_conv1x1(g, p["wg"], p["bg"]),
             p["bn_g_gamma"], p["bn_g_beta"], p["bn_g_mean"], p["bn_g_var"])
    x1 = _bn(_conv1x1(x, p["wx"], p["bx"]),
             p["bn_x_gamma"], p["bn_x_beta"], p["bn_x_mean"], p["bn_x_var"])
    h = jnp.maximum(g1 + x1, 0.0)
    ps = _bn(_conv1x1(h, p["wp"], p["bp"]),
             p["bn_p_gamma"], p["bn_p_beta"], p["bn_p_mean"], p["bn_p_var"])
    return x * jax.nn.sigmoid(ps)


# ---------------------------------------------------------------------------
# Deterministic parameter construction (shapes from the PyTorch __init__).
# ---------------------------------------------------------------------------
def make_params(key, F_g, F_l, F_int):
    ks = jax.random.split(key, 12)
    return {
        "wg": 0.1 * jax.random.normal(ks[0], (F_int, F_g, 1, 1), jnp.float32),
        "bg": 0.1 * jax.random.normal(ks[1], (F_int,), jnp.float32),
        "wx": 0.1 * jax.random.normal(ks[2], (F_int, F_l, 1, 1), jnp.float32),
        "bx": 0.1 * jax.random.normal(ks[3], (F_int,), jnp.float32),
        "wp": 0.1 * jax.random.normal(ks[4], (1, F_int, 1, 1), jnp.float32),
        "bp": 0.1 * jax.random.normal(ks[5], (1,), jnp.float32),
        "bn_g_gamma": 1.0 + 0.05 * jax.random.normal(ks[6], (F_int,), jnp.float32),
        "bn_g_beta": 0.05 * jax.random.normal(ks[7], (F_int,), jnp.float32),
        "bn_g_mean": 0.05 * jax.random.normal(ks[8], (F_int,), jnp.float32),
        "bn_g_var": jnp.abs(1.0 + 0.05 * jax.random.normal(ks[9], (F_int,), jnp.float32)),
        "bn_x_gamma": jnp.ones((F_int,), jnp.float32),
        "bn_x_beta": jnp.zeros((F_int,), jnp.float32),
        "bn_x_mean": jnp.zeros((F_int,), jnp.float32),
        "bn_x_var": jnp.ones((F_int,), jnp.float32),
        "bn_p_gamma": jnp.ones((1,), jnp.float32),
        "bn_p_beta": jnp.zeros((1,), jnp.float32),
        "bn_p_mean": jnp.zeros((1,), jnp.float32),
        "bn_p_var": jnp.ones((1,), jnp.float32),
    }


if __name__ == "__main__":
    # Small shapes consistent with the module: g (N, F_g, H, W), x (N, F_l, H, W).
    N, F_g, F_l, F_int, H, W = 2, 4, 4, 8, 16, 16

    key = jax.random.PRNGKey(0)
    kg, kx, kp = jax.random.split(key, 3)
    g = jax.random.normal(kg, (N, F_g, H, W), jnp.float32)
    x = jax.random.normal(kx, (N, F_l, H, W), jnp.float32)
    params = make_params(kp, F_g, F_l, F_int)

    # Default path: single full-extent lane block per image.
    out = jax.jit(lambda g_, x_: attention_gate(g_, x_, params))(g, x)
    out = jax.block_until_ready(out)

    assert out.shape == (N, F_l, H, W)
    assert bool(jnp.all(jnp.isfinite(out)))

    ref = attention_gate_ref(g, x, params)
    assert bool(jnp.allclose(out, ref, atol=1e-3, rtol=1e-3)), \
        float(jnp.max(jnp.abs(out - ref)))

    # Multi-tile path (P divisible by TP): forces grid iteration over pixels.
    out_tiled = jax.jit(
        lambda g_, x_: attention_gate(g_, x_, params, tile_p=128))(g, x)
    out_tiled = jax.block_until_ready(out_tiled)
    assert bool(jnp.allclose(out_tiled, ref, atol=1e-3, rtol=1e-3))

    # Partial-last-block path (P % TP != 0): Pallas pads reads / masks writes.
    H2 = W2 = 18  # P = 324, TP = 128 -> 3 blocks, last one partial
    g2 = jax.random.normal(kg, (N, F_g, H2, W2), jnp.float32)
    x2 = jax.random.normal(kx, (N, F_l, H2, W2), jnp.float32)
    out2 = jax.jit(
        lambda g_, x_: attention_gate(g_, x_, params, tile_p=128))(g2, x2)
    out2 = jax.block_until_ready(out2)
    ref2 = attention_gate_ref(g2, x2, params)
    assert bool(jnp.allclose(out2, ref2, atol=1e-3, rtol=1e-3))

    print("KERNEL_OK")
</pallas_src>

<mosaic_0001>
module attributes {stable_mosaic.version = 11 : i64} {
  func.func @attention_gate_kernel(%arg0: i32, %arg1: i32, %arg2: memref<1x4x256xf32, #tpu.memory_space<vmem>>, %arg3: memref<1x4x256xf32, #tpu.memory_space<vmem>>, %arg4: memref<8x11xf32, #tpu.memory_space<vmem>>, %arg5: memref<1x4x256xf32, #tpu.memory_space<vmem>>) attributes {dimension_semantics = [#tpu.dimension_semantics<parallel>, #tpu.dimension_semantics<parallel>], iteration_bounds = array<i64: 2, 1>, scalar_prefetch = 0 : i64, scratch_operands = 0 : i64, tpu.core_type = #tpu.core_type<tc>, window_params = [{transform_indices = @transform_0, window_bounds = array<i64: 1, 4, 256>}, {transform_indices = @transform_1, window_bounds = array<i64: 1, 4, 256>}, {pipeline_mode = #tpu.pipeline_mode<synchronous>, transform_indices = @transform_2, window_bounds = array<i64: 8, 11>}, {transform_indices = @transform_3, window_bounds = array<i64: 1, 4, 256>}]} {
    %c0 = arith.constant 0 : index
    %c0_0 = arith.constant 0 : index
    %c0_1 = arith.constant 0 : index
    %0 = vector.load %arg2[%c0, %c0_0, %c0_1] : memref<1x4x256xf32, #tpu.memory_space<vmem>>, vector<1x4x256xf32>
    %1 = vector.shape_cast %0 : vector<1x4x256xf32> to vector<4x256xf32>
    %c0_2 = arith.constant 0 : index
    %c0_3 = arith.constant 0 : index
    %c0_4 = arith.constant 0 : index
    %2 = vector.load %arg3[%c0_2, %c0_3, %c0_4] : memref<1x4x256xf32, #tpu.memory_space<vmem>>, vector<1x4x256xf32>
    %3 = vector.shape_cast %2 : vector<1x4x256xf32> to vector<4x256xf32>
    %c0_5 = arith.constant 0 : index
    %c0_6 = arith.constant 0 : index
    %4 = vector.load %arg4[%c0_5, %c0_6] : memref<8x11xf32, #tpu.memory_space<vmem>>, vector<8x4xf32>
    %c0_7 = arith.constant 0 : index
    %c4 = arith.constant 4 : index
    %5 = vector.load %arg4[%c0_7, %c4] : memref<8x11xf32, #tpu.memory_space<vmem>>, vector<8x4xf32>
    %c0_8 = arith.constant 0 : index
    %c8 = arith.constant 8 : index
    %6 = vector.load %arg4[%c0_8, %c8] : memref<8x11xf32, #tpu.memory_space<vmem>>, vector<8x1xf32>
    %c0_9 = arith.constant 0 : index
    %c9 = arith.constant 9 : index
    %7 = vector.load %arg4[%c0_9, %c9] : memref<8x11xf32, #tpu.memory_space<vmem>>, vector<8x1xf32>
    %c0_10 = arith.constant 0 : index
    %c10 = arith.constant 10 : index
    %8 = vector.load %arg4[%c0_10, %c10] : memref<8x11xf32, #tpu.memory_space<vmem>>, vector<1x1xf32>
    %cst = arith.constant dense<0.000000e+00> : vector<8x256xf32>
    %9 = tpu.matmul %4, %1, %cst {dimension_numbers = #tpu.dot_dimension_numbers<[1], [0], [0], [1], [0, 0, 1, 1], [], []>} : vector<8x4xf32>, vector<4x256xf32>, vector<8x256xf32> -> vector<8x256xf32>
    %cst_11 = arith.constant dense<0.000000e+00> : vector<8x256xf32>
    %10 = tpu.matmul %5, %3, %cst_11 {dimension_numbers = #tpu.dot_dimension_numbers<[1], [0], [0], [1], [0, 0, 1, 1], [], []>} : vector<8x4xf32>, vector<4x256xf32>, vector<8x256xf32> -> vector<8x256xf32>
    %11 = arith.addf %9, %10 : vector<8x256xf32>
    %12 = vector.broadcast %6 : vector<8x1xf32> to vector<8x256xf32>
    %13 = arith.addf %11, %12 : vector<8x256xf32>
    %cst_12 = arith.constant 0.000000e+00 : f32
    %14 = vector.broadcast %cst_12 : f32 to vector<8x256xf32>
    %15 = arith.maximumf %13, %14 : vector<8x256xf32>
    %16 = vector.broadcast %7 : vector<8x1xf32> to vector<8x256xf32>
    %17 = arith.mulf %15, %16 : vector<8x256xf32>
    %cst_13 = arith.constant dense<0.000000e+00> : vector<256xf32>
    %18 = vector.multi_reduction <add>, %17, %cst_13 [0] : vector<8x256xf32> to vector<256xf32>
    %19 = vector.shape_cast %18 : vector<256xf32> to vector<1x256xf32>
    %20 = vector.broadcast %8 : vector<1x1xf32> to vector<1x256xf32>
    %21 = arith.addf %19, %20 : vector<1x256xf32>
    %22 = arith.negf %21 : vector<1x256xf32>
    %23 = math.exp %22 : vector<1x256xf32>
    %cst_14 = arith.constant 1.000000e+00 : f32
    %24 = vector.broadcast %cst_14 : f32 to vector<1x256xf32>
    %25 = arith.addf %24, %23 : vector<1x256xf32>
    %26 = arith.divf %24, %25 : vector<1x256xf32>
    %27 = vector.broadcast %26 : vector<1x256xf32> to vector<4x256xf32>
    %28 = arith.mulf %3, %27 : vector<4x256xf32>
    %c0_15 = arith.constant 0 : index
    %c0_16 = arith.constant 0 : index
    %c0_17 = arith.constant 0 : index
    %29 = vector.load %arg5[%c0_15, %c0_16, %c0_17] : memref<1x4x256xf32, #tpu.memory_space<vmem>>, vector<1x4x256xf32>
    %30 = vector.shape_cast %29 : vector<1x4x256xf32> to vector<4x256xf32>
    %31 = vector.shape_cast %28 : vector<4x256xf32> to vector<1x4x256xf32>
    tpu.vector_store %arg5[%c0_15, %c0_16, %c0_17], %31 {strides = array<i32>} : memref<1x4x256xf32, #tpu.memory_space<vmem>>, vector<1x4x256xf32>,
    return
  }
  func.func @transform_0(%arg0: i32, %arg1: i32) -> (i32, i32, i32) {
    %c0_i32 = arith.constant 0 : i32
    %c0_i32_0 = arith.constant 0 : i32
    return %arg0, %c0_i32, %arg1 : i32, i32, i32
  }
  func.func @transform_1(%arg0: i32, %arg1: i32) -> (i32, i32, i32) {
    %c0_i32 = arith.constant 0 : i32
    %c0_i32_0 = arith.constant 0 : i32
    return %arg0, %c0_i32, %arg1 : i32, i32, i32
  }
  func.func @transform_2(%arg0: i32, %arg1: i32) -> (i32, i32) {
    %c0_i32 = arith.constant 0 : i32
    %c0_i32_0 = arith.constant 0 : i32
    %c0_i32_1 = arith.constant 0 : i32
    return %c0_i32, %c0_i32_0 : i32, i32
  }
  func.func @transform_3(%arg0: i32, %arg1: i32) -> (i32, i32, i32) {
    %c0_i32 = arith.constant 0 : i32
    %c0_i32_0 = arith.constant 0 : i32
    return %arg0, %c0_i32, %arg1 : i32, i32, i32
  }
}

</mosaic_0001>

<llo_original>
// kernel: _lambda_.1
$region0: #{_lambda_.1}
  #allocation0 [shape = 'u32[]', space=smem, size = 0x4, offset = 0x4, fixed_abs, tag = 'smem constant byte address 0x4 - core index']
  #allocation1 [shape = 'u32[72,128]{1,0:T(1,128)}', space=vmem, size = 0x9000, scoped, tag = 'internal scratch']
  %s0 = inlined_call_operand.vmem [shape: f32[2,4,256], index: 0, kind: input, shape index: {}]
  %s1 = inlined_call_operand.vmem [shape: f32[2,4,256], index: 1, kind: input, shape index: {}]
  %s2 = inlined_call_operand.vmem [shape: f32[8,11], index: 2, kind: input, shape index: {}]
  %s3 = inlined_call_operand.vmem [shape: f32[2,4,256], index: 3, kind: output, shape index: {}]
  %s4 = sld [smem:[#allocation0]]
  $region45: #{_lambda_.1} parent=0
    _
  %s6 = ssub.s32 1, %s4
  %s7 = scalar_select 0, %s6, %s4
  loop: start=0, step=1, limit=4
  $region2: #{_lambda_.1} parent=0 // loop_pre_header
    _
  $region3: #{_lambda_.1} parent=0 // loop_header
    %s9 = sphi 0, %s13
    %p10 = scmp.ge.s32.totalorder %s9, 4
    %s16 = sphi 0, %s28
    %s17 = sphi 0, %s24
    %s18 = sphi 0, %s16
    %s19 = sphi 0, %s17
    %s20 = sphi 0, %s18
    %s21 = sphi 0, %s19
    %s33 = sphi 0, %s35
    %s36 = sphi 0, %s33
    %s37 = sphi 0, %s36
    %s53 = sphi 0, %s37
    %s61 = sphi 0, %s63
    %s64 = sphi 0, %s61
    %s65 = sphi 0, %s64
    %s81 = sphi 0, %s65
    %s85 = sphi 0, %s85
    %s87 = sphi 0, %s85
    %s88 = sphi 0, %s87
    %s102 = sphi 0, %s88
    %s110 = sphi 0, %s112
    %s113 = sphi 0, %s110
    %s114 = sphi 0, %s113
    %s130 = sphi 0, %s114
  $region4: #{_lambda_.1} parent=0 // loop_header_branch
    %12 = sbr.rel (%p10) target = $region8
  $region5: #{_lambda_.1} parent=0 // loop_body
    %s14 = ssub.s32 %s9, 1
    %s15 = ssub.s32 %s9, 2
    %s22 = sadd.s32 1, %s17
    %p23 = scmp.ge.s32.totalorder %s22, 1
    %s24 = scalar_select %p23, 0, %s22
    %s25 = sadd.s32 1, %s16
    %s26 = scalar_select %p23, %s25, %s16
    %p27 = scmp.ge.s32.totalorder %s26, 2
    %s28 = scalar_select %p27, 0, %s26
    %s29 = ssub.s32 %s16, %s28
    %s30 = ssub.s32 %s17, %s24
    %s31 = sor.u32 %s29, %s30
    %p32 = scmp.eq.s32.totalorder %s31, 0
    %s34 = sadd.s32 %s33, 1
    %s35 = scalar_select %p32, %s33, %s34
    %p38 = pneg %p32
    %p39 = scmp.eq.s32.totalorder %s9, 1
    %p40 = por %p38, %p39
    %p41 = scmp.ne.s32.totalorder %s33, %s36
    %p42 = scmp.eq.s32.totalorder %s9, 0
    %p43 = por %p41, %p42
    %p44 = scmp.ne.s32.totalorder %s33, %s36
    %p45 = scmp.eq.s32.totalorder %s14, 1
    %p46 = por %p44, %p45
    %p47 = scmp.ne.s32.totalorder %s36, %s37
    %p48 = scmp.eq.s32.totalorder %s14, 0
    %p49 = por %p47, %p48
    %p50 = scmp.ne.s32.totalorder %s36, %s37
    %p51 = scmp.eq.s32.totalorder %s15, 1
    %p52 = por %p50, %p51
    %p54 = scmp.ne.s32.totalorder %s37, %s53
    %p55 = scmp.eq.s32.totalorder %s15, 0
    %p56 = por %p54, %p55
    %s57 = ssub.s32 %s16, %s28
    %s58 = ssub.s32 %s17, %s24
    %s59 = sor.u32 %s57, %s58
    %p60 = scmp.eq.s32.totalorder %s59, 0
    %s62 = sadd.s32 %s61, 1
    %s63 = scalar_select %p60, %s61, %s62
    %p66 = pneg %p60
    %p67 = scmp.eq.s32.totalorder %s9, 1
    %p68 = por %p66, %p67
    %p69 = scmp.ne.s32.totalorder %s61, %s64
    %p70 = scmp.eq.s32.totalorder %s9, 0
    %p71 = por %p69, %p70
    %p72 = scmp.ne.s32.totalorder %s61, %s64
    %p73 = scmp.eq.s32.totalorder %s14, 1
    %p74 = por %p72, %p73
    %p75 = scmp.ne.s32.totalorder %s64, %s65
    %p76 = scmp.eq.s32.totalorder %s14, 0
    %p77 = por %p75, %p76
    %p78 = scmp.ne.s32.totalorder %s64, %s65
    %p79 = scmp.eq.s32.totalorder %s15, 1
    %p80 = por %p78, %p79
    %p82 = scmp.ne.s32.totalorder %s65, %s81
    %p83 = scmp.eq.s32.totalorder %s15, 0
    %p84 = por %p82, %p83
    %s86 = sadd.s32 %s85, 1
    %p89 = scmp.eq.s32.totalorder %s9, 1
    %p90 = scmp.ne.s32.totalorder %s85, %s87
    %p91 = scmp.eq.s32.totalorder %s9, 0
    %p92 = por %p90, %p91
    %p93 = scmp.ne.s32.totalorder %s85, %s87
    %p94 = scmp.eq.s32.totalorder %s14, 1
    %p95 = por %p93, %p94
    %p96 = scmp.ne.s32.totalorder %s87, %s88
    %p97 = scmp.eq.s32.totalorder %s14, 0
    %p98 = por %p96, %p97
    %p99 = scmp.ne.s32.totalorder %s87, %s88
    %p100 = scmp.eq.s32.totalorder %s15, 1
    %p101 = por %p99, %p100
    %p103 = scmp.ne.s32.totalorder %s88, %s102
    %p104 = scmp.eq.s32.totalorder %s15, 0
    %p105 = por %p103, %p104
    %s106 = ssub.s32 %s16, %s28
    %s107 = ssub.s32 %s17, %s24
    %s108 = sor.u32 %s106, %s107
    %p109 = scmp.eq.s32.totalorder %s108, 0
    %s111 = sadd.s32 %s110, 1
    %s112 = scalar_select %p109, %s110, %s111
    %p115 = pneg %p109
    %p116 = scmp.eq.s32.totalorder %s9, 1
    %p117 = por %p115, %p116
    %p118 = scmp.ne.s32.totalorder %s110, %s113
    %p119 = scmp.eq.s32.totalorder %s9, 0
    %p120 = por %p118, %p119
    %p121 = scmp.ne.s32.totalorder %s110, %s113
    %p122 = scmp.eq.s32.totalorder %s14, 1
    %p123 = por %p121, %p122
    %p124 = scmp.ne.s32.totalorder %s113, %s114
    %p125 = scmp.eq.s32.totalorder %s14, 0
    %p126 = por %p124, %p125
    %p127 = scmp.ne.s32.totalorder %s113, %s114
    %p128 = scmp.eq.s32.totalorder %s15, 1
    %p129 = por %p127, %p128
    %p131 = scmp.ne.s32.totalorder %s114, %s130
    %p132 = scmp.eq.s32.totalorder %s15, 0
    %p133 = por %p131, %p132
    %p134 = scmp.le.s32.totalorder 1, %s9
    %p135 = scmp.lt.s32.totalorder %s9, 3
    %p136 = pnand %p134, %p135
    %p137 = pneg %p136
    // Predicated region
    $region9: #{_lambda_.1} parent=5 // pred_check
      _
    $region10: #{_lambda_.1} parent=5 // pred_check_branch
      %139 = sbr.rel (%p136) target = $region12
    $region11: #{_lambda_.1} parent=5 // pred_region
      %s140 = ssub.s32 %s9, 1
      // Predicated region
      $region13: #{_lambda_.1} parent=11 // pred_check
        %p141 = pneg %p98
      $region14: #{_lambda_.1} parent=11 // pred_check_branch
        %143 = sbr.rel (%p141) target = $region16
      $region15: #{_lambda_.1} parent=11 // pred_region
        _
      $region16: #{_lambda_.1} parent=11 // pred_fallthru
        _
    $region12: #{_lambda_.1} parent=5 // pred_fallthru
      _
    %p144 = scmp.lt.s32.totalorder %s9, 2
    // Predicated region
    $region17: #{_lambda_.1} parent=5 // pred_check
      %p145 = pneg %p144
    $region18: #{_lambda_.1} parent=5 // pred_check_branch
      %147 = sbr.rel (%p145) target = $region20
    $region19: #{_lambda_.1} parent=5 // pred_region
      // Predicated region
      $region21: #{_lambda_.1} parent=19 // pred_check
        %p148 = pneg %p43
      $region22: #{_lambda_.1} parent=19 // pred_check_branch
        %150 = sbr.rel (%p148) target = $region24
      $region23: #{_lambda_.1} parent=19 // pred_region
        %s151 = smul.u32 2, %s17
        %p152 = scmp.lt.s32.totalorder %s16, 1
        %s153 = scalar_select %p152, %s16, 1
        %p154 = scmp.lt.s32.totalorder %s151, 1
        %s155 = scalar_select %p154, %s151, 1
        %s156 = smul.addr %s153, 2
        %s157 = sadd.s32 %s155, %s156
        %s158 = smul.addr %s157, 4
        %s159 = scalar_lea.vmem %s0, %s158
        %s160 = smul.u32 2, %s17
      $region24: #{_lambda_.1} parent=19 // pred_fallthru
        _
      // Predicated region
      $region25: #{_lambda_.1} parent=19 // pred_check
        %p161 = pneg %p71
      $region26: #{_lambda_.1} parent=19 // pred_check_branch
        %163 = sbr.rel (%p161) target = $region28
      $region27: #{_lambda_.1} parent=19 // pred_region
        %s164 = smul.u32 2, %s17
        %p165 = scmp.lt.s32.totalorder %s16, 1
        %s166 = scalar_select %p165, %s16, 1
        %p167 = scmp.lt.s32.totalorder %s164, 1
        %s168 = scalar_select %p167, %s164, 1
        %s169 = smul.addr %s166, 2
        %s170 = sadd.s32 %s168, %s169
        %s171 = smul.addr %s170, 4
        %s172 = scalar_lea.vmem %s1, %s171
        %s173 = smul.u32 2, %s17
      $region28: #{_lambda_.1} parent=19 // pred_fallthru
        _
    $region20: #{_lambda_.1} parent=5 // pred_fallthru
      _
    %p174 = scmp.le.s32.totalorder 1, %s9
    %p175 = scmp.lt.s32.totalorder %s9, 3
    %p176 = pnand %p174, %p175
    %p177 = pneg %p176
    // Predicated region
    $region29: #{_lambda_.1} parent=5 // pred_check
      _
    $region30: #{_lambda_.1} parent=5 // pred_check_branch
      %179 = sbr.rel (%p176) target = $region32
    $region31: #{_lambda_.1} parent=5 // pred_region
      %s180 = ssub.s32 %s9, 1
      %s181 = smul.u32 2, %s19
      %p182 = scmp.lt.s32.totalorder %s18, 1
      %s183 = scalar_select %p182, %s18, 1
      %p184 = scmp.lt.s32.totalorder %s181, 1
      %s185 = scalar_select %p184, %s181, 1
      %s186 = smul.addr %s183, 2
      %s187 = sadd.s32 %s185, %s186
      %s188 = smul.addr %s187, 4
      %s189 = scalar_lea.vmem %s0, %s188
      %p190 = pneg %p49
      %p191 = pneg %p46
      %s192 = smul.u32 2, %s19
      %p193 = scmp.lt.s32.totalorder %s18, 1
      %s194 = scalar_select %p193, %s18, 1
      %p195 = scmp.lt.s32.totalorder %s192, 1
      %s196 = scalar_select %p195, %s192, 1
      %s197 = smul.addr %s194, 2
      %s198 = sadd.s32 %s196, %s197
      %s199 = smul.addr %s198, 4
      %s200 = scalar_lea.vmem %s1, %s199
      %p201 = pneg %p77
      %p202 = pneg %p74
      %p203 = pneg %p98
      %p204 = pneg %p95
      %p205 = pneg %p126
      %p206 = pneg %p123
      %s207 = smul.u32 2, %s19
      %p208 = scmp.lt.s32.totalorder %s18, 1
      %s209 = scalar_select %p208, %s18, 1
      %p210 = scmp.lt.s32.totalorder %s207, 1
      %s211 = scalar_select %p210, %s207, 1
      %s212 = smul.addr %s209, 2
      %s213 = sadd.s32 %s211, %s212
      %s214 = smul.addr %s213, 4
      %s215 = scalar_lea.vmem %s3, %s214
      %s216 = smul.u32 2, %s19
      %p217 = scmp.lt.s32.totalorder %s18, 1
      %s218 = scalar_select %p217, %s18, 1
      %p219 = scmp.lt.s32.totalorder %s216, 1
      %s220 = scalar_select %p219, %s216, 1
      %s221 = smul.addr %s218, 2
      %s222 = sadd.s32 %s220, %s221
      %s223 = smul.addr %s222, 4
      %s224 = scalar_lea.vmem %s0, %s223
      %s225 = smul.u32 2, %s19
      %s226 = smul.u32 2, %s19
      %p227 = scmp.lt.s32.totalorder %s18, 1
      %s228 = scalar_select %p227, %s18, 1
      %p229 = scmp.lt.s32.totalorder %s226, 1
      %s230 = scalar_select %p229, %s226, 1
      %s231 = smul.addr %s228, 2
      %s232 = sadd.s32 %s230, %s231
      %s233 = smul.addr %s232, 4
      %s234 = scalar_lea.vmem %s1, %s233
      %s235 = smul.u32 2, %s19
      %s236 = smul.u32 2, %s19
      %p237 = scmp.lt.s32.totalorder %s18, 1
      %s238 = scalar_select %p237, %s18, 1
      %p239 = scmp.lt.s32.totalorder %s236, 1
      %s240 = scalar_select %p239, %s236, 1
      %s241 = smul.addr %s238, 2
      %s242 = sadd.s32 %s240, %s241
      %s243 = smul.addr %s242, 4
      %s244 = scalar_lea.vmem %s3, %s243
      %s245 = smul.u32 2, %s19
      %v246 = vld [vmem:[%s224] sm:$0xff]
      %v247 = vld [vmem:[%s234] sm:$0xff]
      %v248 = vld [vmem:[%s2] sm:$0xff]
      %v249 = vld [vmem:[%s2] sm:$0x1]
      %251 = vrot.lane.b32.xlu0 %v248, 124
      %v252 = vpop.permute.xlu0 %251
      %254 = vst [vmem:[#allocation1] ss:$2 sm:$0xff] %v247
      %v255 = vld.sshfl [vmem:[#allocation1] sm:$0xff pattern:$0x75316420]
      %v256 = vld.sshfl [vmem:[#allocation1 + $0x8] sm:$0xff pattern:$0x75316420]
      %vm257 = vcmask 31744
      %v258 = vsel %vm257, %v252, 0
      %vm260 = vcmask 1043456
      %v261 = vsel %vm260, %v255, 0
      %v263 = vsel %vm260, %v256, 0
      %265 = vmatpush.msra.mxu0 0.0
      %266 = vmatpush.msra.mxu0 0.0
      %267 = vmatpush.msra.mxu0 0.0
      %268 = vmatpush.msra.mxu0 0.0
      %269 = vmatpush.msra.mxu0 0.0
      %270 = vmatpush.msra.mxu0 0.0
      %271 = vmatpush.msra.mxu0 0.0
      %272 = vmatpush.msra.mxu0 0.0
      %273 = vmatpush.msra.mxu0 0.0
      %274 = vmatpush.msra.mxu0 0.0
      %275 = vmatpush.msra.mxu0 0.0
      %276 = vmatpush.msra.mxu0 0.0
      %277 = vmatpush.msra.mxu0 0.0
      %278 = vmatpush.msra.mxu0 0.0
      %279 = vmatpush.msra.mxu0 0.0
      %280 = vmatpush.msra.mxu0 %v261
      %281 = vmatmul.f32.gmra.mxu0 %v258
      %v282 = vpop.f32.mrf.mxu0
      %v283 = vadd.f32 0.0, %v282
      %284 = vdwg.mxu0
      %285 = vmatpush.msra.mxu0 0.0
      %286 = vmatpush.msra.mxu0 0.0
      %287 = vmatpush.msra.mxu0 0.0
      %288 = vmatpush.msra.mxu0 0.0
      %289 = vmatpush.msra.mxu0 0.0
      %290 = vmatpush.msra.mxu0 0.0
      %291 = vmatpush.msra.mxu0 0.0
      %292 = vmatpush.msra.mxu0 0.0
      %293 = vmatpush.msra.mxu0 0.0
      %294 = vmatpush.msra.mxu0 0.0
      %295 = vmatpush.msra.mxu0 0.0
      %296 = vmatpush.msra.mxu0 0.0
      %297 = vmatpush.msra.mxu0 0.0
      %298 = vmatpush.msra.mxu0 0.0
      %299 = vmatpush.msra.mxu0 0.0
      %300 = vmatpush.msra.mxu0 %v263
      %301 = vmatmul.f32.gmra.mxu0 %v258
      %v302 = vpop.f32.mrf.mxu0
      %v303 = vadd.f32 0.0, %v302
      %304 = vdwg.mxu0
      %306 = vst [vmem:[#allocation1] ss:$2 sm:$0xff] %v246
      %v307 = vld.sshfl [vmem:[#allocation1] sm:$0xff pattern:$0x75316420]
      %v308 = vld.sshfl [vmem:[#allocation1 + $0x8] sm:$0xff pattern:$0x75316420]
      %v309 = vsel %vm257, %v248, 0
      %v311 = vsel %vm260, %v307, 0
      %v313 = vsel %vm260, %v308, 0
      %315 = vmatpush.msra.mxu0 0.0
      %316 = vmatpush.msra.mxu0 0.0
      %317 = vmatpush.msra.mxu0 0.0
      %318 = vmatpush.msra.mxu0 0.0
      %319 = vmatpush.msra.mxu0 0.0
      %320 = vmatpush.msra.mxu0 0.0
      %321 = vmatpush.msra.mxu0 0.0
      %322 = vmatpush.msra.mxu0 0.0
      %323 = vmatpush.msra.mxu0 0.0
      %324 = vmatpush.msra.mxu0 0.0
      %325 = vmatpush.msra.mxu0 0.0
      %326 = vmatpush.msra.mxu0 0.0
      %327 = vmatpush.msra.mxu0 0.0
      %328 = vmatpush.msra.mxu0 0.0
      %329 = vmatpush.msra.mxu0 0.0
      %330 = vmatpush.msra.mxu0 %v311
      %331 = vmatmul.f32.gmra.mxu0 %v309
      %v332 = vpop.f32.mrf.mxu0
      %v333 = vadd.f32 %v283, %v332
      %334 = vdwg.mxu0
      %335 = vmatpush.msra.mxu0 0.0
      %336 = vmatpush.msra.mxu0 0.0
      %337 = vmatpush.msra.mxu0 0.0
      %338 = vmatpush.msra.mxu0 0.0
      %339 = vmatpush.msra.mxu0 0.0
      %340 = vmatpush.msra.mxu0 0.0
      %341 = vmatpush.msra.mxu0 0.0
      %342 = vmatpush.msra.mxu0 0.0
      %343 = vmatpush.msra.mxu0 0.0
      %344 = vmatpush.msra.mxu0 0.0
      %345 = vmatpush.msra.mxu0 0.0
      %346 = vmatpush.msra.mxu0 0.0
      %347 = vmatpush.msra.mxu0 0.0
      %348 = vmatpush.msra.mxu0 0.0
      %349 = vmatpush.msra.mxu0 0.0
      %350 = vmatpush.msra.mxu0 %v313
      %351 = vmatmul.f32.gmra.mxu0 %v309
      %v352 = vpop.f32.mrf.mxu0
      %v353 = vadd.f32 %v303, %v352
      %354 = vdwg.mxu0
      %355 = vset.pattern.permute.xlu0 8
      %356 = vperm.xlu0 %355, %v248
      %v357 = vpop.permute.xlu0 %356
      %v359 = vadd.f32 %v333, %v357
      %v360 = vadd.f32 %v353, %v357
      %v361 = vmax.f32 %v359, 0.0
      %v362 = vmax.f32 %v360, 0.0
      %363 = vset.pattern.permute.xlu0 9
      %364 = vperm.xlu0 %363, %v248
      %v365 = vpop.permute.xlu0 %364
      %v367 = vmul.f32 %v361, %v365
      %v368 = vmul.f32 %v362, %v365
      %v369 = vrot.slane %v367, 4
      %v370 = vadd.f32 %v367, %v369
      %v371 = vrot.slane %v370, 2
      %v372 = vadd.f32 %v370, %v371
      %v373 = vrot.slane %v372, 1
      %v374 = vadd.f32 %v372, %v373
      %v375 = vrot.slane %v368, 4
      %v376 = vadd.f32 %v368, %v375
      %v377 = vrot.slane %v376, 2
      %v378 = vadd.f32 %v376, %v377
      %v379 = vrot.slane %v378, 1
      %v380 = vadd.f32 %v378, %v379
      %382 = vset.pattern.permute.xlu0 10
      %383 = vperm.xlu0 %382, %v249
      %v384 = vpop.permute.xlu0 %383
      %v386 = vadd.f32 %v374, %v384
      %v387 = vadd.f32 %v380, %v384
      %v388 = vxor.u32 %v386, 2147483648
      %v389 = vxor.u32 %v387, 2147483648
      %v390 = vmul.f32 %v388, 1.442695
      %v391 = vpow.pop %v390
      %v392 = vmul.f32 %v389, 1.442695
      %v393 = vpow.pop %v392
      %v394 = vadd.f32 %v391, 1.0
      %v395 = vadd.f32 %v393, 1.0
      %v396 = vrcp.pop %v394
      %v397 = vmul.f32 %v394, %v396
      %v398 = vsub.f32 1.0, %v397
      %v399 = vmul.f32 %v396, %v398
      %v400 = vadd.f32 %v396, %v399
      %vm401 = vweird.f32 %v394
      %vm402 = vweird.f32 %v396
      %vm403 = vmor %vm401, %vm402
      %v404 = vsel %vm403, %v396, %v400
      %v405 = vand.u32 2147483647, %v394
      %vm406 = vcmp.eq.f32.partialorder %v405, 8.507059e+37
      %v407 = vand.u32 %v394, 2147483648
      %v408 = vor.u32 1.1754944e-38, %v407
      %v409 = vsel %vm406, %v408, %v404
      %v410 = vmul.f32 1.0, %v409
      %v411 = vrcp.pop %v395
      %v412 = vmul.f32 %v395, %v411
      %v413 = vsub.f32 1.0, %v412
      %v414 = vmul.f32 %v411, %v413
      %v415 = vadd.f32 %v411, %v414
      %vm416 = vweird.f32 %v395
      %vm417 = vweird.f32 %v411
      %vm418 = vmor %vm416, %vm417
      %v419 = vsel %vm418, %v411, %v415
      %v420 = vand.u32 2147483647, %v395
      %vm421 = vcmp.eq.f32.partialorder %v420, 8.507059e+37
      %v422 = vand.u32 %v395, 2147483648
      %v423 = vor.u32 1.1754944e-38, %v422
      %v424 = vsel %vm421, %v423, %v419
      %v425 = vmul.f32 1.0, %v424
      %v426 = vperm.slane %v410, 0
      %v427 = vperm.slane %v425, 0
      %v430 = vrot.slane %v427, 4
      %v431 = vsel %vm260, %v426, %v430
      %v433 = vmul.f32 %v247, %v431
      %434 = vst [vmem:[%s244] sm:$0xff] %v433
      %s435 = smul.u32 2, %s19
      %p436 = scmp.lt.s32.totalorder %s18, 1
      %s437 = scalar_select %p436, %s18, 1
      %p438 = scmp.lt.s32.totalorder %s435, 1
      %s439 = scalar_select %p438, %s435, 1
      %s440 = smul.addr %s437, 2
      %s441 = sadd.s32 %s439, %s440
      %s442 = smul.addr %s441, 4
      %s443 = scalar_lea.vmem %s3, %s442
      // Predicated region
      $region33: #{_lambda_.1} parent=31 // pred_check
        %p444 = pneg %p123
      $region34: #{_lambda_.1} parent=31 // pred_check_branch
        %446 = sbr.rel (%p444) target = $region36
      $region35: #{_lambda_.1} parent=31 // pred_region
        %s447 = smul.u32 2, %s19
      $region36: #{_lambda_.1} parent=31 // pred_fallthru
        _
    $region32: #{_lambda_.1} parent=5 // pred_fallthru
      _
    %p448 = scmp.le.s32.totalorder 2, %s9
    // Predicated region
    $region37: #{_lambda_.1} parent=5 // pred_check
      %p449 = pneg %p448
    $region38: #{_lambda_.1} parent=5 // pred_check_branch
      %451 = sbr.rel (%p449) target = $region40
    $region39: #{_lambda_.1} parent=5 // pred_region
      %s452 = ssub.s32 %s9, 2
      // Predicated region
      $region41: #{_lambda_.1} parent=39 // pred_check
        %p453 = pneg %p129
      $region42: #{_lambda_.1} parent=39 // pred_check_branch
        %455 = sbr.rel (%p453) target = $region44
      $region43: #{_lambda_.1} parent=39 // pred_region
        %s456 = smul.u32 2, %s21
        %p457 = scmp.lt.s32.totalorder %s20, 1
        %s458 = scalar_select %p457, %s20, 1
        %p459 = scmp.lt.s32.totalorder %s456, 1
        %s460 = scalar_select %p459, %s456, 1
        %s461 = smul.addr %s458, 2
        %s462 = sadd.s32 %s460, %s461
        %s463 = smul.addr %s462, 4
        %s464 = scalar_lea.vmem %s3, %s463
      $region44: #{_lambda_.1} parent=39 // pred_fallthru
        _
    $region40: #{_lambda_.1} parent=5 // pred_fallthru
      _
  $region6: #{_lambda_.1} parent=0 // loop_footer
    %s13 = sadd.s32 1, %s9
  $region7: #{_lambda_.1} parent=0 // loop_footer_branch
    %8 = sbr.rel target = $region3
  $region8: #{_lambda_.1} parent=0 // loop_exit
    _

</llo_original>
